<compile_context>
chip_gen: v7x
topology: tpu7x:2x2x1
jax: 0.10.0
libtpu: 0.0.40
codegen_flags: <defaults>
</compile_context>

<pallas_src>
import math
import functools

import jax
import jax.numpy as jnp
from jax.experimental import pallas as pl
from jax.experimental.pallas import tpu as pltpu


def _round_up(x, m):
    return ((x + m - 1) // m) * m


def ffn_kernel(x_ref, w_ref, b_ref, o_ref, acc_ref):
    # x_ref: (tm, tk) bf16   w_ref: (tk, tn) bf16   b_ref: (1, tn) f32
    # o_ref: (tm, tn) f32    acc_ref: (tm, tn) f32 scratch
    k = pl.program_id(2)

    @pl.when(k == 0)
    def _():
        acc_ref[...] = jnp.zeros_like(acc_ref)

    acc_ref[...] += jnp.dot(
        x_ref[...], w_ref[...], preferred_element_type=jnp.float32
    )

    @pl.when(k == pl.num_programs(2) - 1)
    def _():
        y = acc_ref[...] + b_ref[...]          # bias broadcast over the M tile
        o_ref[...] = jnp.maximum(y, 0.0)       # ReLU epilogue, f32, once per (i,j)


@functools.partial(jax.jit, static_argnames=("tm", "tn", "tk"))
def ffn_forward(x, w_t, b, *, tm=128, tn=128, tk=256):
    """FFN forward: ReLU(x @ w_t + b).

    x:   (B, IN)   float32
    w_t: (IN, OUT) float32 (transposed nn.Linear weight)
    b:   (OUT,)    float32
    returns (B, OUT) float32
    """
    B, IN = x.shape
    OUT = w_t.shape[1]

    # Pad to MXU/lane-aligned tile multiples; zero-padding is exact for matmul,
    # and ReLU(0 + 0) = 0 in padded output columns, which we slice away anyway.
    Mp = _round_up(B, tm)
    Kp = _round_up(IN, tk)
    Np = _round_up(OUT, tn)

    x_p = jnp.pad(x, ((0, Mp - B), (0, Kp - IN))).astype(jnp.bfloat16)
    w_p = jnp.pad(w_t, ((0, Kp - IN), (0, Np - OUT))).astype(jnp.bfloat16)
    b_p = jnp.pad(b, (0, Np - OUT)).astype(jnp.float32).reshape(1, Np)

    grid = (Mp // tm, Np // tn, Kp // tk)

    # VMEM budget: double-buffered bf16 input tiles + bias + f32 acc + output.
    vmem_est = (
        2 * (tm * tk + tk * tn) * 2      # x/w tiles, double-buffered, bf16
        + 2 * tn * 4                     # bias tile
        + tm * tn * 4                    # accumulator scratch
        + 2 * tm * tn * 4                # output tile, double-buffered
    )
    vmem_limit = min(max(2 * vmem_est, 16 * 1024 * 1024), 48 * 1024 * 1024)

    out_p = pl.pallas_call(
        ffn_kernel,
        out_shape=jax.ShapeDtypeStruct((Mp, Np), jnp.float32),
        grid_spec=pltpu.PrefetchScalarGridSpec(
            num_scalar_prefetch=0,
            grid=grid,
            in_specs=[
                pl.BlockSpec((tm, tk), lambda i, j, k: (i, k)),
                pl.BlockSpec((tk, tn), lambda i, j, k: (k, j)),
                pl.BlockSpec((1, tn), lambda i, j, k: (0, j)),
            ],
            out_specs=pl.BlockSpec((tm, tn), lambda i, j, k: (i, j)),
            scratch_shapes=[pltpu.VMEM((tm, tn), jnp.float32)],
        ),
        compiler_params=pltpu.CompilerParams(
            dimension_semantics=("parallel", "parallel", "arbitrary"),
            vmem_limit_bytes=vmem_limit,
        ),
    )(x_p, w_p, b_p)

    return out_p[:B, :OUT]


def init_ffn_params(key, input_size, final_size):
    """Kaiming-uniform (fan_in, relu) weight, zero bias — matches FFN.init_layer."""
    # gain(relu) = sqrt(2); bound = gain * sqrt(3 / fan_in) = sqrt(6 / fan_in)
    bound = math.sqrt(6.0 / input_size)
    w = jax.random.uniform(key, (final_size, input_size), jnp.float32,
                           minval=-bound, maxval=bound)   # PyTorch layout (out, in)
    b = jnp.zeros((final_size,), jnp.float32)
    return w, b


if __name__ == "__main__":
    # Shapes consistent with FFN defaults (input_size=200, final_size=200), small batch.
    batch, input_size, final_size = 16, 200, 200

    key = jax.random.PRNGKey(0)
    kx, kw = jax.random.split(key)
    x = jax.random.normal(kx, (batch, input_size), jnp.float32)
    w, b = init_ffn_params(kw, input_size, final_size)

    out = ffn_forward(x, w.T, b)
    out = jax.block_until_ready(out)

    # Sanity-check vs pure JAX f32 reference (kernel uses bf16 MXU inputs -> relaxed tol).
    ref = jnp.maximum(x @ w.T + b, 0.0)
    assert out.shape == (batch, final_size)
    assert jnp.allclose(out, ref, atol=2e-2, rtol=2e-2), "mismatch vs reference"

    print("KERNEL_OK")
</pallas_src>

<mosaic_0001>
module attributes {stable_mosaic.version = 11 : i64} {
  func.func @ffn_kernel(%arg0: i32, %arg1: i32, %arg2: i32, %arg3: memref<128x256xbf16, #tpu.memory_space<vmem>>, %arg4: memref<256x128xbf16, #tpu.memory_space<vmem>>, %arg5: memref<1x128xf32, #tpu.memory_space<vmem>>, %arg6: memref<128x128xf32, #tpu.memory_space<vmem>>, %arg7: memref<128x128xf32, #tpu.memory_space<vmem>>) attributes {dimension_semantics = [#tpu.dimension_semantics<parallel>, #tpu.dimension_semantics<parallel>, #tpu.dimension_semantics<arbitrary>], iteration_bounds = array<i64: 1, 2, 1>, scalar_prefetch = 0 : i64, scratch_operands = 1 : i64, tpu.core_type = #tpu.core_type<tc>, window_params = [{transform_indices = @transform_0, window_bounds = array<i64: 128, 256>}, {transform_indices = @transform_1, window_bounds = array<i64: 256, 128>}, {transform_indices = @transform_2, window_bounds = array<i64: 1, 128>}, {transform_indices = @transform_3, window_bounds = array<i64: 128, 128>}]} {
    %c0_i32 = arith.constant 0 : i32
    %0 = arith.cmpi eq, %arg2, %c0_i32 : i32
    %1 = arith.extui %0 : i1 to i32
    %c0_i32_0 = arith.constant 0 : i32
    %2 = arith.cmpi ne, %1, %c0_i32_0 : i32
    scf.if %2 {
      %cst_10 = arith.constant 0.000000e+00 : f32
      %12 = vector.broadcast %cst_10 : f32 to vector<128x128xf32>
      %c0_11 = arith.constant 0 : index
      %c0_12 = arith.constant 0 : index
      %13 = vector.load %arg7[%c0_11, %c0_12] : memref<128x128xf32, #tpu.memory_space<vmem>>, vector<128x128xf32>
      tpu.vector_store %arg7[%c0_11, %c0_12], %12 {strides = array<i32>} : memref<128x128xf32, #tpu.memory_space<vmem>>, vector<128x128xf32>,
    } else {
    }
    %c0 = arith.constant 0 : index
    %c0_1 = arith.constant 0 : index
    %3 = vector.load %arg7[%c0, %c0_1] : memref<128x128xf32, #tpu.memory_space<vmem>>, vector<128x128xf32>
    %c0_2 = arith.constant 0 : index
    %c0_3 = arith.constant 0 : index
    %4 = vector.load %arg3[%c0_2, %c0_3] : memref<128x256xbf16, #tpu.memory_space<vmem>>, vector<128x256xbf16>
    %c0_4 = arith.constant 0 : index
    %c0_5 = arith.constant 0 : index
    %5 = vector.load %arg4[%c0_4, %c0_5] : memref<256x128xbf16, #tpu.memory_space<vmem>>, vector<256x128xbf16>
    %cst = arith.constant dense<0.000000e+00> : vector<128x128xf32>
    %6 = tpu.matmul %4, %5, %cst {dimension_numbers = #tpu.dot_dimension_numbers<[1], [0], [0], [1], [0, 0, 1, 1], [], []>} : vector<128x256xbf16>, vector<256x128xbf16>, vector<128x128xf32> -> vector<128x128xf32>
    %7 = arith.addf %3, %6 : vector<128x128xf32>
    %c0_6 = arith.constant 0 : index
    %c0_7 = arith.constant 0 : index
    %8 = vector.load %arg7[%c0_6, %c0_7] : memref<128x128xf32, #tpu.memory_space<vmem>>, vector<128x128xf32>
    tpu.vector_store %arg7[%c0_6, %c0_7], %7 {strides = array<i32>} : memref<128x128xf32, #tpu.memory_space<vmem>>, vector<128x128xf32>,
    %c0_i32_8 = arith.constant 0 : i32
    %9 = arith.cmpi eq, %arg2, %c0_i32_8 : i32
    %10 = arith.extui %9 : i1 to i32
    %c0_i32_9 = arith.constant 0 : i32
    %11 = arith.cmpi ne, %10, %c0_i32_9 : i32
    scf.if %11 {
      %c0_10 = arith.constant 0 : index
      %c0_11 = arith.constant 0 : index
      %12 = vector.load %arg7[%c0_10, %c0_11] : memref<128x128xf32, #tpu.memory_space<vmem>>, vector<128x128xf32>
      %c0_12 = arith.constant 0 : index
      %c0_13 = arith.constant 0 : index
      %13 = vector.load %arg5[%c0_12, %c0_13] : memref<1x128xf32, #tpu.memory_space<vmem>>, vector<1x128xf32>
      %14 = vector.broadcast %13 : vector<1x128xf32> to vector<128x128xf32>
      %15 = arith.addf %12, %14 : vector<128x128xf32>
      %cst_14 = arith.constant 0.000000e+00 : f32
      %16 = vector.broadcast %cst_14 : f32 to vector<128x128xf32>
      %17 = arith.maximumf %15, %16 : vector<128x128xf32>
      %c0_15 = arith.constant 0 : index
      %c0_16 = arith.constant 0 : index
      %18 = vector.load %arg6[%c0_15, %c0_16] : memref<128x128xf32, #tpu.memory_space<vmem>>, vector<128x128xf32>
      tpu.vector_store %arg6[%c0_15, %c0_16], %17 {strides = array<i32>} : memref<128x128xf32, #tpu.memory_space<vmem>>, vector<128x128xf32>,
    } else {
    }
    return
  }
  func.func @transform_0(%arg0: i32, %arg1: i32, %arg2: i32) -> (i32, i32) {
    %c0_i32 = arith.constant 0 : i32
    return %arg0, %arg2 : i32, i32
  }
  func.func @transform_1(%arg0: i32, %arg1: i32, %arg2: i32) -> (i32, i32) {
    %c0_i32 = arith.constant 0 : i32
    return %arg2, %arg1 : i32, i32
  }
  func.func @transform_2(%arg0: i32, %arg1: i32, %arg2: i32) -> (i32, i32) {
    %c0_i32 = arith.constant 0 : i32
    %c0_i32_0 = arith.constant 0 : i32
    return %c0_i32, %arg1 : i32, i32
  }
  func.func @transform_3(%arg0: i32, %arg1: i32, %arg2: i32) -> (i32, i32) {
    %c0_i32 = arith.constant 0 : i32
    return %arg0, %arg1 : i32, i32
  }
}

</mosaic_0001>

<llo_original>
// kernel: ffn_forward.1
$region0: #{ffn_forward.1}
  #allocation0 [shape = 'u32[]', space=smem, size = 0x4, offset = 0x4, fixed_abs, tag = 'smem constant byte address 0x4 - core index']
  #allocation1 [shape = 'u32[144,128]{1,0:T(1,128)}', space=vmem, size = 0x12000, scoped, tag = 'internal scratch']
  #allocation2 [shape = 'f32[128,128]{1,0:T(8,128)}', space=vmem, size = 0x10000, scoped, tag = 'scratch operand']
  %s0 = inlined_call_operand.vmem [shape: bf16[128,256], index: 0, kind: input, shape index: {}]
  %s1 = inlined_call_operand.vmem [shape: bf16[256,256], index: 1, kind: input, shape index: {}]
  %s2 = inlined_call_operand.vmem [shape: f32[1,256], index: 2, kind: input, shape index: {}]
  %s3 = inlined_call_operand.vmem [shape: f32[128,256], index: 3, kind: output, shape index: {}]
  %s4 = sld [smem:[#allocation0]]
  $region128: #{ffn_forward.1} parent=0
    _
  %s6 = ssub.s32 1, %s4
  %s7 = scalar_select 0, %s6, %s4
  $region1: #{ffn_forward.1} parent=0
    #allocation3 [shape = 'u8[131072]{0}', space=vmem, size = 0x20000, scoped, tag = 'input window, operand 1']
    #allocation4 [shape = 'u8[131072]{0}', space=vmem, size = 0x20000, scoped, tag = 'output window, operand 0']
    loop: start=0, step=1, limit=4
    $region2: #{ffn_forward.1} parent=1 // loop_pre_header
      _
    $region3: #{ffn_forward.1} parent=1 // loop_header
      %s9 = sphi 0, %s13
      %p10 = scmp.ge.s32.totalorder %s9, 4
      %s16 = sphi 0, %s35
      %s17 = sphi 0, %s31
      %s18 = sphi 0, %s27
      %s19 = sphi 0, %s16
      %s20 = sphi 0, %s17
      %s21 = sphi 0, %s18
      %s22 = sphi 0, %s19
      %s23 = sphi 0, %s20
      %s24 = sphi 0, %s21
      %s40 = sphi 0, %s42
      %s43 = sphi 0, %s40
      %s44 = sphi 0, %s43
      %s60 = sphi 0, %s44
      %s68 = sphi 0, %s70
      %s71 = sphi 0, %s68
      %s72 = sphi 0, %s71
      %s88 = sphi 0, %s72
      %s94 = sphi 0, %s96
      %s97 = sphi 0, %s94
      %s98 = sphi 0, %s97
      %s114 = sphi 0, %s98
      %s122 = sphi 0, %s124
      %s125 = sphi 0, %s122
      %s126 = sphi 0, %s125
      %s142 = sphi 0, %s126
    $region4: #{ffn_forward.1} parent=1 // loop_header_branch
      %12 = sbr.rel (%p10) target = $region8
    $region5: #{ffn_forward.1} parent=1 // loop_body
      %s14 = ssub.s32 %s9, 1
      %s15 = ssub.s32 %s9, 2
      %s25 = sadd.s32 1, %s18
      %p26 = scmp.ge.s32.totalorder %s25, 1
      %s27 = scalar_select %p26, 0, %s25
      %s28 = sadd.s32 1, %s17
      %s29 = scalar_select %p26, %s28, %s17
      %p30 = scmp.ge.s32.totalorder %s29, 2
      %s31 = scalar_select %p30, 0, %s29
      %s32 = sadd.s32 1, %s16
      %s33 = scalar_select %p30, %s32, %s16
      %p34 = scmp.ge.s32.totalorder %s33, 1
      %s35 = scalar_select %p34, 0, %s33
      %s36 = ssub.s32 %s16, %s35
      %s37 = ssub.s32 %s18, %s27
      %s38 = sor.u32 %s36, %s37
      %p39 = scmp.eq.s32.totalorder %s38, 0
      %s41 = sadd.s32 %s40, 1
      %s42 = scalar_select %p39, %s40, %s41
      %p45 = pneg %p39
      %p46 = scmp.eq.s32.totalorder %s9, 1
      %p47 = por %p45, %p46
      %p48 = scmp.ne.s32.totalorder %s40, %s43
      %p49 = scmp.eq.s32.totalorder %s9, 0
      %p50 = por %p48, %p49
      %p51 = scmp.ne.s32.totalorder %s40, %s43
      %p52 = scmp.eq.s32.totalorder %s14, 1
      %p53 = por %p51, %p52
      %p54 = scmp.ne.s32.totalorder %s43, %s44
      %p55 = scmp.eq.s32.totalorder %s14, 0
      %p56 = por %p54, %p55
      %p57 = scmp.ne.s32.totalorder %s43, %s44
      %p58 = scmp.eq.s32.totalorder %s15, 1
      %p59 = por %p57, %p58
      %p61 = scmp.ne.s32.totalorder %s44, %s60
      %p62 = scmp.eq.s32.totalorder %s15, 0
      %p63 = por %p61, %p62
      %s64 = ssub.s32 %s18, %s27
      %s65 = ssub.s32 %s17, %s31
      %s66 = sor.u32 %s64, %s65
      %p67 = scmp.eq.s32.totalorder %s66, 0
      %s69 = sadd.s32 %s68, 1
      %s70 = scalar_select %p67, %s68, %s69
      %p73 = pneg %p67
      %p74 = scmp.eq.s32.totalorder %s9, 1
      %p75 = por %p73, %p74
      %p76 = scmp.ne.s32.totalorder %s68, %s71
      %p77 = scmp.eq.s32.totalorder %s9, 0
      %p78 = por %p76, %p77
      %p79 = scmp.ne.s32.totalorder %s68, %s71
      %p80 = scmp.eq.s32.totalorder %s14, 1
      %p81 = por %p79, %p80
      %p82 = scmp.ne.s32.totalorder %s71, %s72
      %p83 = scmp.eq.s32.totalorder %s14, 0
      %p84 = por %p82, %p83
      %p85 = scmp.ne.s32.totalorder %s71, %s72
      %p86 = scmp.eq.s32.totalorder %s15, 1
      %p87 = por %p85, %p86
      %p89 = scmp.ne.s32.totalorder %s72, %s88
      %p90 = scmp.eq.s32.totalorder %s15, 0
      %p91 = por %p89, %p90
      %s92 = ssub.s32 %s17, %s31
      %p93 = scmp.eq.s32.totalorder %s92, 0
      %s95 = sadd.s32 %s94, 1
      %s96 = scalar_select %p93, %s94, %s95
      %p99 = pneg %p93
      %p100 = scmp.eq.s32.totalorder %s9, 1
      %p101 = por %p99, %p100
      %p102 = scmp.ne.s32.totalorder %s94, %s97
      %p103 = scmp.eq.s32.totalorder %s9, 0
      %p104 = por %p102, %p103
      %p105 = scmp.ne.s32.totalorder %s94, %s97
      %p106 = scmp.eq.s32.totalorder %s14, 1
      %p107 = por %p105, %p106
      %p108 = scmp.ne.s32.totalorder %s97, %s98
      %p109 = scmp.eq.s32.totalorder %s14, 0
      %p110 = por %p108, %p109
      %p111 = scmp.ne.s32.totalorder %s97, %s98
      %p112 = scmp.eq.s32.totalorder %s15, 1
      %p113 = por %p111, %p112
      %p115 = scmp.ne.s32.totalorder %s98, %s114
      %p116 = scmp.eq.s32.totalorder %s15, 0
      %p117 = por %p115, %p116
      %s118 = ssub.s32 %s16, %s35
      %s119 = ssub.s32 %s17, %s31
      %s120 = sor.u32 %s118, %s119
      %p121 = scmp.eq.s32.totalorder %s120, 0
      %s123 = sadd.s32 %s122, 1
      %s124 = scalar_select %p121, %s122, %s123
      %p127 = pneg %p121
      %p128 = scmp.eq.s32.totalorder %s9, 1
      %p129 = por %p127, %p128
      %p130 = scmp.ne.s32.totalorder %s122, %s125
      %p131 = scmp.eq.s32.totalorder %s9, 0
      %p132 = por %p130, %p131
      %p133 = scmp.ne.s32.totalorder %s122, %s125
      %p134 = scmp.eq.s32.totalorder %s14, 1
      %p135 = por %p133, %p134
      %p136 = scmp.ne.s32.totalorder %s125, %s126
      %p137 = scmp.eq.s32.totalorder %s14, 0
      %p138 = por %p136, %p137
      %p139 = scmp.ne.s32.totalorder %s125, %s126
      %p140 = scmp.eq.s32.totalorder %s15, 1
      %p141 = por %p139, %p140
      %p143 = scmp.ne.s32.totalorder %s126, %s142
      %p144 = scmp.eq.s32.totalorder %s15, 0
      %p145 = por %p143, %p144
      %p146 = scmp.le.s32.totalorder 1, %s9
      %p147 = scmp.lt.s32.totalorder %s9, 3
      %p148 = pnand %p146, %p147
      %p149 = pneg %p148
      // Predicated region
      $region9: #{ffn_forward.1} parent=5 // pred_check
        _
      $region10: #{ffn_forward.1} parent=5 // pred_check_branch
        %151 = sbr.rel (%p148) target = $region12
      $region11: #{ffn_forward.1} parent=5 // pred_region
        %s152 = ssub.s32 %s9, 1
        // Predicated region
        $region13: #{ffn_forward.1} parent=11 // pred_check
          %p153 = pneg %p56
        $region14: #{ffn_forward.1} parent=11 // pred_check_branch
          %155 = sbr.rel (%p153) target = $region16
        $region15: #{ffn_forward.1} parent=11 // pred_region
          %s156 = smul.u32 16, %s19
          %s157 = smul.u32 2, %s21
          %p158 = scmp.lt.s32.totalorder %s156, 15
          %s159 = scalar_select %p158, %s156, 15
          %p160 = scmp.lt.s32.totalorder %s157, 1
          %s161 = scalar_select %p160, %s157, 1
          %s162 = smul.addr %s159, 2
          %s163 = sadd.s32 %s161, %s162
          %s164 = smul.addr %s163, 4
          %s165 = scalar_lea.vmem %s0, %s164
          %s166 = smul.u32 16, %s19
          %s167 = smul.u32 2, %s21
        $region16: #{ffn_forward.1} parent=11 // pred_fallthru
          _
      $region12: #{ffn_forward.1} parent=5 // pred_fallthru
        _
      %p168 = scmp.lt.s32.totalorder %s9, 2
      // Predicated region
      $region17: #{ffn_forward.1} parent=5 // pred_check
        %p169 = pneg %p168
      $region18: #{ffn_forward.1} parent=5 // pred_check_branch
        %171 = sbr.rel (%p169) target = $region20
      $region19: #{ffn_forward.1} parent=5 // pred_region
        // Predicated region
        $region21: #{ffn_forward.1} parent=19 // pred_check
          %p172 = pneg %p78
        $region22: #{ffn_forward.1} parent=19 // pred_check_branch
          %174 = sbr.rel (%p172) target = $region24
        $region23: #{ffn_forward.1} parent=19 // pred_region
          %s175 = sand.u32 %s68, 1
          %s176 = sand.u32 %s68, 1
          %s177 = smul.addr %s176, 128
          %s178 = scalar_lea.vmem [#allocation3], %s177
          %s179 = smul.u32 32, %s18
          %s180 = smul.addr %s179, 2
          %s181 = sadd.s32 %s17, %s180
          %s182 = smul.addr %s181, 4
          %s183 = scalar_lea.vmem %s1, %s182
          // Predicated region
          $region25: #{ffn_forward.1} parent=23 // pred_check
            _
          $region26: #{ffn_forward.1} parent=23 // pred_check_branch
            %185 = sbr.rel (0) target = $region28
          $region27: #{ffn_forward.1} parent=23 // pred_region
            // Predicated region
            $region29: #{ffn_forward.1} parent=27 // pred_check
              _
            $region30: #{ffn_forward.1} parent=27 // pred_check_branch
              %187 = sbr.rel target = $region32
            $region31: #{ffn_forward.1} parent=27 // pred_region
              // Predicated region
              $region44: #{ffn_forward.1} parent=31 // pred_check
                _
              $region45: #{ffn_forward.1} parent=31 // pred_check_branch
                %264 = sbr.rel (0) target = $region47
              $region46: #{ffn_forward.1} parent=31 // pred_region
                loop: start=0, step=1, limit=1
                $region48: #{ffn_forward.1} parent=46 // loop_pre_header
                  _
                $region49: #{ffn_forward.1} parent=46 // loop_header
                  %s266 = sphi 0, %s270
                  %p267 = scmp.ge.s32.totalorder %s266, 1
                  %s271 = sphi %s183, %s183
                  %s272 = sphi %s178, %s178
                $region50: #{ffn_forward.1} parent=46 // loop_header_branch
                  %269 = sbr.rel (%p267) target = $region54
                $region51: #{ffn_forward.1} parent=46 // loop_body
                  _
                $region52: #{ffn_forward.1} parent=46 // loop_footer
                  %s270 = sadd.s32 1, %s266
                $region53: #{ffn_forward.1} parent=46 // loop_footer_branch
                  %265 = sbr.rel target = $region49
                $region54: #{ffn_forward.1} parent=46 // loop_exit
                  _
                loop: start=0, step=1, limit=1
                $region55: #{ffn_forward.1} parent=46 // loop_pre_header
                  _
                $region56: #{ffn_forward.1} parent=46 // loop_header
                  %s275 = sphi 0, %s279
                  %p276 = scmp.ge.s32.totalorder %s275, 1
                  %s280 = sphi %s183, %s183
                  %s281 = sphi %s178, %s178
                $region57: #{ffn_forward.1} parent=46 // loop_header_branch
                  %278 = sbr.rel (%p276) target = $region61
                $region58: #{ffn_forward.1} parent=46 // loop_body
                  %v282 = vld [vmem:[%s280] sm:$0xf]
                  %283 = vst [vmem:[%s281] sm:$0xf] %v282
                  %v284 = vld [vmem:[%s280 + $0x8] sm:$0xf]
                  %285 = vst [vmem:[%s281 + $0x4] sm:$0xf] %v284
                  %v286 = vld [vmem:[%s280 + $0x10] sm:$0xf]
                  %287 = vst [vmem:[%s281 + $0x8] sm:$0xf] %v286
                  %v288 = vld [vmem:[%s280 + $0x18] sm:$0xf]
                  %289 = vst [vmem:[%s281 + $0xc] sm:$0xf] %v288
                  %v290 = vld [vmem:[%s280 + $0x20] sm:$0xf]
                  %291 = vst [vmem:[%s281 + $0x10] sm:$0xf] %v290
                  %v292 = vld [vmem:[%s280 + $0x28] sm:$0xf]
                  %293 = vst [vmem:[%s281 + $0x14] sm:$0xf] %v292
                  %v294 = vld [vmem:[%s280 + $0x30] sm:$0xf]
                  %295 = vst [vmem:[%s281 + $0x18] sm:$0xf] %v294
                  %v296 = vld [vmem:[%s280 + $0x38] sm:$0xf]
                  %297 = vst [vmem:[%s281 + $0x1c] sm:$0xf] %v296
                  %v298 = vld [vmem:[%s280 + $0x40] sm:$0xf]
                  %299 = vst [vmem:[%s281 + $0x20] sm:$0xf] %v298
                  %v300 = vld [vmem:[%s280 + $0x48] sm:$0xf]
                  %301 = vst [vmem:[%s281 + $0x24] sm:$0xf] %v300
                  %v302 = vld [vmem:[%s280 + $0x50] sm:$0xf]
                  %303 = vst [vmem:[%s281 + $0x28] sm:$0xf] %v302
                  %v304 = vld [vmem:[%s280 + $0x58] sm:$0xf]
                  %305 = vst [vmem:[%s281 + $0x2c] sm:$0xf] %v304
                  %v306 = vld [vmem:[%s280 + $0x60] sm:$0xf]
                  %307 = vst [vmem:[%s281 + $0x30] sm:$0xf] %v306
                  %v308 = vld [vmem:[%s280 + $0x68] sm:$0xf]
                  %309 = vst [vmem:[%s281 + $0x34] sm:$0xf] %v308
                  %v310 = vld [vmem:[%s280 + $0x70] sm:$0xf]
                  %311 = vst [vmem:[%s281 + $0x38] sm:$0xf] %v310
                  %v312 = vld [vmem:[%s280 + $0x78] sm:$0xf]
                  %313 = vst [vmem:[%s281 + $0x3c] sm:$0xf] %v312
                  %v314 = vld [vmem:[%s280 + $0x80] sm:$0xf]
                  %315 = vst [vmem:[%s281 + $0x40] sm:$0xf] %v314
                  %v316 = vld [vmem:[%s280 + $0x88] sm:$0xf]
                  %317 = vst [vmem:[%s281 + $0x44] sm:$0xf] %v316
                  %v318 = vld [vmem:[%s280 + $0x90] sm:$0xf]
                  %319 = vst [vmem:[%s281 + $0x48] sm:$0xf] %v318
                  %v320 = vld [vmem:[%s280 + $0x98] sm:$0xf]
                  %321 = vst [vmem:[%s281 + $0x4c] sm:$0xf] %v320
                  %v322 = vld [vmem:[%s280 + $0xa0] sm:$0xf]
                  %323 = vst [vmem:[%s281 + $0x50] sm:$0xf] %v322
                  %v324 = vld [vmem:[%s280 + $0xa8] sm:$0xf]
                  %325 = vst [vmem:[%s281 + $0x54] sm:$0xf] %v324
                  %v326 = vld [vmem:[%s280 + $0xb0] sm:$0xf]
                  %327 = vst [vmem:[%s281 + $0x58] sm:$0xf] %v326
                  %v328 = vld [vmem:[%s280 + $0xb8] sm:$0xf]
                  %329 = vst [vmem:[%s281 + $0x5c] sm:$0xf] %v328
                  %v330 = vld [vmem:[%s280 + $0xc0] sm:$0xf]
                  %331 = vst [vmem:[%s281 + $0x60] sm:$0xf] %v330
                  %v332 = vld [vmem:[%s280 + $0xc8] sm:$0xf]
                  %333 = vst [vmem:[%s281 + $0x64] sm:$0xf] %v332
                  %v334 = vld [vmem:[%s280 + $0xd0] sm:$0xf]
                  %335 = vst [vmem:[%s281 + $0x68] sm:$0xf] %v334
                  %v336 = vld [vmem:[%s280 + $0xd8] sm:$0xf]
                  %337 = vst [vmem:[%s281 + $0x6c] sm:$0xf] %v336
                  %v338 = vld [vmem:[%s280 + $0xe0] sm:$0xf]
                  %339 = vst [vmem:[%s281 + $0x70] sm:$0xf] %v338
                  %v340 = vld [vmem:[%s280 + $0xe8] sm:$0xf]
                  %341 = vst [vmem:[%s281 + $0x74] sm:$0xf] %v340
                  %v342 = vld [vmem:[%s280 + $0xf0] sm:$0xf]
                  %343 = vst [vmem:[%s281 + $0x78] sm:$0xf] %v342
                  %v344 = vld [vmem:[%s280 + $0xf8] sm:$0xf]
                  %345 = vst [vmem:[%s281 + $0x7c] sm:$0xf] %v344
                $region59: #{ffn_forward.1} parent=46 // loop_footer
                  %s279 = sadd.s32 1, %s275
                $region60: #{ffn_forward.1} parent=46 // loop_footer_branch
                  %274 = sbr.rel target = $region56
                $region61: #{ffn_forward.1} parent=46 // loop_exit
                  _
              $region47: #{ffn_forward.1} parent=31 // pred_fallthru
                _
            $region32: #{ffn_forward.1} parent=27 // pred_fallthru
              _
            // Predicated region
            $region33: #{ffn_forward.1} parent=27 // pred_check
              _
            $region34: #{ffn_forward.1} parent=27 // pred_check_branch
              %189 = sbr.rel (0) target = $region36
            $region35: #{ffn_forward.1} parent=27 // pred_region
              loop: start=0, step=1, limit=1
              $region37: #{ffn_forward.1} parent=35 // loop_pre_header
                _
              $region38: #{ffn_forward.1} parent=35 // loop_header
                %s192 = sphi 0, %s196
                %p193 = scmp.ge.s32.totalorder %s192, 1
                %s197 = sphi %s183, %s183
                %s198 = sphi %s178, %s178
              $region39: #{ffn_forward.1} parent=35 // loop_header_branch
                %195 = sbr.rel (%p193) target = $region43
              $region40: #{ffn_forward.1} parent=35 // loop_body
                %v199 = vld [vmem:[%s197] sm:$0xf]
                %200 = vst [vmem:[%s198] sm:$0xf] %v199
                %v201 = vld [vmem:[%s197 + $0x8] sm:$0xf]
                %202 = vst [vmem:[%s198 + $0x4] sm:$0xf] %v201
                %v203 = vld [vmem:[%s197 + $0x10] sm:$0xf]
                %204 = vst [vmem:[%s198 + $0x8] sm:$0xf] %v203
                %v205 = vld [vmem:[%s197 + $0x18] sm:$0xf]
                %206 = vst [vmem:[%s198 + $0xc] sm:$0xf] %v205
                %v207 = vld [vmem:[%s197 + $0x20] sm:$0xf]
                %208 = vst [vmem:[%s198 + $0x10] sm:$0xf] %v207
                %v209 = vld [vmem:[%s197 + $0x28] sm:$0xf]
                %210 = vst [vmem:[%s198 + $0x14] sm:$0xf] %v209
                %v211 = vld [vmem:[%s197 + $0x30] sm:$0xf]
                %212 = vst [vmem:[%s198 + $0x18] sm:$0xf] %v211
                %v213 = vld [vmem:[%s197 + $0x38] sm:$0xf]
                %214 = vst [vmem:[%s198 + $0x1c] sm:$0xf] %v213
                %v215 = vld [vmem:[%s197 + $0x40] sm:$0xf]
                %216 = vst [vmem:[%s198 + $0x20] sm:$0xf] %v215
                %v217 = vld [vmem:[%s197 + $0x48] sm:$0xf]
                %218 = vst [vmem:[%s198 + $0x24] sm:$0xf] %v217
                %v219 = vld [vmem:[%s197 + $0x50] sm:$0xf]
                %220 = vst [vmem:[%s198 + $0x28] sm:$0xf] %v219
                %v221 = vld [vmem:[%s197 + $0x58] sm:$0xf]
                %222 = vst [vmem:[%s198 + $0x2c] sm:$0xf] %v221
                %v223 = vld [vmem:[%s197 + $0x60] sm:$0xf]
                %224 = vst [vmem:[%s198 + $0x30] sm:$0xf] %v223
                %v225 = vld [vmem:[%s197 + $0x68] sm:$0xf]
                %226 = vst [vmem:[%s198 + $0x34] sm:$0xf] %v225
                %v227 = vld [vmem:[%s197 + $0x70] sm:$0xf]
                %228 = vst [vmem:[%s198 + $0x38] sm:$0xf] %v227
                %v229 = vld [vmem:[%s197 + $0x78] sm:$0xf]
                %230 = vst [vmem:[%s198 + $0x3c] sm:$0xf] %v229
                %v231 = vld [vmem:[%s197 + $0x80] sm:$0xf]
                %232 = vst [vmem:[%s198 + $0x40] sm:$0xf] %v231
                %v233 = vld [vmem:[%s197 + $0x88] sm:$0xf]
                %234 = vst [vmem:[%s198 + $0x44] sm:$0xf] %v233
                %v235 = vld [vmem:[%s197 + $0x90] sm:$0xf]
                %236 = vst [vmem:[%s198 + $0x48] sm:$0xf] %v235
                %v237 = vld [vmem:[%s197 + $0x98] sm:$0xf]
                %238 = vst [vmem:[%s198 + $0x4c] sm:$0xf] %v237
                %v239 = vld [vmem:[%s197 + $0xa0] sm:$0xf]
                %240 = vst [vmem:[%s198 + $0x50] sm:$0xf] %v239
                %v241 = vld [vmem:[%s197 + $0xa8] sm:$0xf]
                %242 = vst [vmem:[%s198 + $0x54] sm:$0xf] %v241
                %v243 = vld [vmem:[%s197 + $0xb0] sm:$0xf]
                %244 = vst [vmem:[%s198 + $0x58] sm:$0xf] %v243
                %v245 = vld [vmem:[%s197 + $0xb8] sm:$0xf]
                %246 = vst [vmem:[%s198 + $0x5c] sm:$0xf] %v245
                %v247 = vld [vmem:[%s197 + $0xc0] sm:$0xf]
                %248 = vst [vmem:[%s198 + $0x60] sm:$0xf] %v247
                %v249 = vld [vmem:[%s197 + $0xc8] sm:$0xf]
                %250 = vst [vmem:[%s198 + $0x64] sm:$0xf] %v249
                %v251 = vld [vmem:[%s197 + $0xd0] sm:$0xf]
                %252 = vst [vmem:[%s198 + $0x68] sm:$0xf] %v251
                %v253 = vld [vmem:[%s197 + $0xd8] sm:$0xf]
                %254 = vst [vmem:[%s198 + $0x6c] sm:$0xf] %v253
                %v255 = vld [vmem:[%s197 + $0xe0] sm:$0xf]
                %256 = vst [vmem:[%s198 + $0x70] sm:$0xf] %v255
                %v257 = vld [vmem:[%s197 + $0xe8] sm:$0xf]
                %258 = vst [vmem:[%s198 + $0x74] sm:$0xf] %v257
                %v259 = vld [vmem:[%s197 + $0xf0] sm:$0xf]
                %260 = vst [vmem:[%s198 + $0x78] sm:$0xf] %v259
                %v261 = vld [vmem:[%s197 + $0xf8] sm:$0xf]
                %262 = vst [vmem:[%s198 + $0x7c] sm:$0xf] %v261
              $region41: #{ffn_forward.1} parent=35 // loop_footer
                %s196 = sadd.s32 1, %s192
              $region42: #{ffn_forward.1} parent=35 // loop_footer_branch
                %191 = sbr.rel target = $region38
              $region43: #{ffn_forward.1} parent=35 // loop_exit
                _
            $region36: #{ffn_forward.1} parent=27 // pred_fallthru
              _
          $region28: #{ffn_forward.1} parent=23 // pred_fallthru
            _
          %346 = vnop
        $region24: #{ffn_forward.1} parent=19 // pred_fallthru
          _
        // Predicated region
        $region62: #{ffn_forward.1} parent=19 // pred_check
          %p347 = pneg %p104
        $region63: #{ffn_forward.1} parent=19 // pred_check_branch
          %349 = sbr.rel (%p347) target = $region65
        $region64: #{ffn_forward.1} parent=19 // pred_region
          %p350 = scmp.lt.s32.totalorder %s17, 1
          %s351 = scalar_select %p350, %s17, 1
          %s352 = scalar_lea.vmem %s2, %s351
        $region65: #{ffn_forward.1} parent=19 // pred_fallthru
          _
      $region20: #{ffn_forward.1} parent=5 // pred_fallthru
        _
      %p353 = scmp.le.s32.totalorder 1, %s9
      %p354 = scmp.lt.s32.totalorder %s9, 3
      %p355 = pnand %p353, %p354
      %p356 = pneg %p355
      // Predicated region
      $region66: #{ffn_forward.1} parent=5 // pred_check
        _
      $region67: #{ffn_forward.1} parent=5 // pred_check_branch
        %358 = sbr.rel (%p355) target = $region69
      $region68: #{ffn_forward.1} parent=5 // pred_region
        %s359 = ssub.s32 %s9, 1
        %s360 = sand.u32 %s71, 1
        %s361 = sand.u32 %s71, 1
        %s362 = smul.addr %s361, 128
        %s363 = scalar_lea.vmem [#allocation3], %s362
        // Predicated region
        $region70: #{ffn_forward.1} parent=68 // pred_check
          %p364 = pneg %p84
        $region71: #{ffn_forward.1} parent=68 // pred_check_branch
          %366 = sbr.rel (%p364) target = $region73
        $region72: #{ffn_forward.1} parent=68 // pred_region
          _
        $region73: #{ffn_forward.1} parent=68 // pred_fallthru
          _
        %s367 = smul.u32 16, %s19
        %s368 = smul.u32 2, %s21
        %p369 = scmp.lt.s32.totalorder %s367, 15
        %s370 = scalar_select %p369, %s367, 15
        %p371 = scmp.lt.s32.totalorder %s368, 1
        %s372 = scalar_select %p371, %s368, 1
        %s373 = smul.addr %s370, 2
        %s374 = sadd.s32 %s372, %s373
        %s375 = smul.addr %s374, 4
        %s376 = scalar_lea.vmem %s0, %s375
        %p377 = pneg %p56
        %p378 = pneg %p53
        %s379 = sand.u32 %s71, 1
        %s380 = sand.u32 %s71, 1
        %s381 = smul.addr %s380, 128
        %s382 = scalar_lea.vmem [#allocation3], %s381
        %p383 = pneg %p84
        %p384 = pneg %p81
        %p385 = scmp.lt.s32.totalorder %s20, 1
        %s386 = scalar_select %p385, %s20, 1
        %s387 = scalar_lea.vmem %s2, %s386
        %p388 = pneg %p110
        %p389 = pneg %p107
        %p390 = pneg %p138
        %p391 = pneg %p135
        %s392 = sand.u32 %s125, 1
        %s393 = sand.u32 %s125, 1
        %s394 = smul.addr %s393, 128
        %s395 = scalar_lea.vmem [#allocation4], %s394
        %s396 = smul.u32 16, %s19
        %s397 = smul.u32 2, %s21
        %p398 = scmp.lt.s32.totalorder %s396, 15
        %s399 = scalar_select %p398, %s396, 15
        %p400 = scmp.lt.s32.totalorder %s397, 1
        %s401 = scalar_select %p400, %s397, 1
        %s402 = smul.addr %s399, 2
        %s403 = sadd.s32 %s401, %s402
        %s404 = smul.addr %s403, 4
        %s405 = scalar_lea.vmem %s0, %s404
        %s406 = smul.u32 16, %s19
        %s407 = smul.u32 2, %s21
        %s408 = smul.u32 32, %s21
        %p409 = scmp.lt.s32.totalorder %s20, 1
        %s410 = scalar_select %p409, %s20, 1
        %s411 = scalar_lea.vmem %s2, %s410
        %s412 = smul.u32 16, %s19
        %p414 = scmp.eq.s32.totalorder %s21, 0
        // Predicated region
        $region74: #{ffn_forward.1} parent=68 // pred_check
          %p415 = pneg %p414
        $region75: #{ffn_forward.1} parent=68 // pred_check_branch
          %417 = sbr.rel (%p415) target = $region77
        $region76: #{ffn_forward.1} parent=68 // pred_region
          %418 = vst [vmem:[#allocation2] sm:$0xff] 0.0
          %419 = vst [vmem:[#allocation2 + $0x8] sm:$0xff] 0.0
          %420 = vst [vmem:[#allocation2 + $0x10] sm:$0xff] 0.0
          %421 = vst [vmem:[#allocation2 + $0x18] sm:$0xff] 0.0
          %422 = vst [vmem:[#allocation2 + $0x20] sm:$0xff] 0.0
          %423 = vst [vmem:[#allocation2 + $0x28] sm:$0xff] 0.0
          %424 = vst [vmem:[#allocation2 + $0x30] sm:$0xff] 0.0
          %425 = vst [vmem:[#allocation2 + $0x38] sm:$0xff] 0.0
          %426 = vst [vmem:[#allocation2 + $0x40] sm:$0xff] 0.0
          %427 = vst [vmem:[#allocation2 + $0x48] sm:$0xff] 0.0
          %428 = vst [vmem:[#allocation2 + $0x50] sm:$0xff] 0.0
          %429 = vst [vmem:[#allocation2 + $0x58] sm:$0xff] 0.0
          %430 = vst [vmem:[#allocation2 + $0x60] sm:$0xff] 0.0
          %431 = vst [vmem:[#allocation2 + $0x68] sm:$0xff] 0.0
          %432 = vst [vmem:[#allocation2 + $0x70] sm:$0xff] 0.0
          %433 = vst [vmem:[#allocation2 + $0x78] sm:$0xff] 0.0
        $region77: #{ffn_forward.1} parent=68 // pred_fallthru
          _
        %v434 = vld [vmem:[#allocation2] sm:$0xff]
        %v435 = vld [vmem:[#allocation2 + $0x8] sm:$0xff]
        %v436 = vld [vmem:[#allocation2 + $0x10] sm:$0xff]
        %v437 = vld [vmem:[#allocation2 + $0x18] sm:$0xff]
        %v438 = vld [vmem:[#allocation2 + $0x20] sm:$0xff]
        %v439 = vld [vmem:[#allocation2 + $0x28] sm:$0xff]
        %v440 = vld [vmem:[#allocation2 + $0x30] sm:$0xff]
        %v441 = vld [vmem:[#allocation2 + $0x38] sm:$0xff]
        %v442 = vld [vmem:[#allocation2 + $0x40] sm:$0xff]
        %v443 = vld [vmem:[#allocation2 + $0x48] sm:$0xff]
        %v444 = vld [vmem:[#allocation2 + $0x50] sm:$0xff]
        %v445 = vld [vmem:[#allocation2 + $0x58] sm:$0xff]
        %v446 = vld [vmem:[#allocation2 + $0x60] sm:$0xff]
        %v447 = vld [vmem:[#allocation2 + $0x68] sm:$0xff]
        %v448 = vld [vmem:[#allocation2 + $0x70] sm:$0xff]
        %v449 = vld [vmem:[#allocation2 + $0x78] sm:$0xff]
        %v450 = vld [vmem:[%s405] sm:$0xff]
        %v451 = vld [vmem:[%s405 + $0x8] sm:$0xff]
        %v452 = vld [vmem:[%s405 + $0x10] sm:$0xff]
        %v453 = vld [vmem:[%s405 + $0x18] sm:$0xff]
        %v454 = vld [vmem:[%s405 + $0x20] sm:$0xff]
        %v455 = vld [vmem:[%s405 + $0x28] sm:$0xff]
        %v456 = vld [vmem:[%s405 + $0x30] sm:$0xff]
        %v457 = vld [vmem:[%s405 + $0x38] sm:$0xff]
        %v458 = vld [vmem:[%s405 + $0x40] sm:$0xff]
        %v459 = vld [vmem:[%s405 + $0x48] sm:$0xff]
        %v460 = vld [vmem:[%s405 + $0x50] sm:$0xff]
        %v461 = vld [vmem:[%s405 + $0x58] sm:$0xff]
        %v462 = vld [vmem:[%s405 + $0x60] sm:$0xff]
        %v463 = vld [vmem:[%s405 + $0x68] sm:$0xff]
        %v464 = vld [vmem:[%s405 + $0x70] sm:$0xff]
        %v465 = vld [vmem:[%s405 + $0x78] sm:$0xff]
        %v466 = vld [vmem:[%s363] sm:$0xf]
        %v467 = vld [vmem:[%s363 + $0x4] sm:$0xf]
        %v468 = vld [vmem:[%s363 + $0x8] sm:$0xf]
        %v469 = vld [vmem:[%s363 + $0xc] sm:$0xf]
        %v470 = vld [vmem:[%s363 + $0x10] sm:$0xf]
        %v471 = vld [vmem:[%s363 + $0x14] sm:$0xf]
        %v472 = vld [vmem:[%s363 + $0x18] sm:$0xf]
        %v473 = vld [vmem:[%s363 + $0x1c] sm:$0xf]
        %v474 = vld [vmem:[%s363 + $0x20] sm:$0xf]
        %v475 = vld [vmem:[%s363 + $0x24] sm:$0xf]
        %v476 = vld [vmem:[%s363 + $0x28] sm:$0xf]
        %v477 = vld [vmem:[%s363 + $0x2c] sm:$0xf]
        %v478 = vld [vmem:[%s363 + $0x30] sm:$0xf]
        %v479 = vld [vmem:[%s363 + $0x34] sm:$0xf]
        %v480 = vld [vmem:[%s363 + $0x38] sm:$0xf]
        %v481 = vld [vmem:[%s363 + $0x3c] sm:$0xf]
        %v482 = vld [vmem:[%s363 + $0x40] sm:$0xf]
        %v483 = vld [vmem:[%s363 + $0x44] sm:$0xf]
        %v484 = vld [vmem:[%s363 + $0x48] sm:$0xf]
        %v485 = vld [vmem:[%s363 + $0x4c] sm:$0xf]
        %v486 = vld [vmem:[%s363 + $0x50] sm:$0xf]
        %v487 = vld [vmem:[%s363 + $0x54] sm:$0xf]
        %v488 = vld [vmem:[%s363 + $0x58] sm:$0xf]
        %v489 = vld [vmem:[%s363 + $0x5c] sm:$0xf]
        %v490 = vld [vmem:[%s363 + $0x60] sm:$0xf]
        %v491 = vld [vmem:[%s363 + $0x64] sm:$0xf]
        %v492 = vld [vmem:[%s363 + $0x68] sm:$0xf]
        %v493 = vld [vmem:[%s363 + $0x6c] sm:$0xf]
        %v494 = vld [vmem:[%s363 + $0x70] sm:$0xf]
        %v495 = vld [vmem:[%s363 + $0x74] sm:$0xf]
        %v496 = vld [vmem:[%s363 + $0x78] sm:$0xf]
        %v497 = vld [vmem:[%s363 + $0x7c] sm:$0xf]
        %v514 = vunpack.c.l.b16 %v450
        %v515 = vunpack.c.h.b16 %v450
        %v516 = vunpack.c.l.b16 %v451
        %v517 = vunpack.c.h.b16 %v451
        %v518 = vunpack.c.l.b16 %v452
        %v519 = vunpack.c.h.b16 %v452
        %v520 = vunpack.c.l.b16 %v453
        %v521 = vunpack.c.h.b16 %v453
        %v522 = vunpack.c.l.b16 %v454
        %v523 = vunpack.c.h.b16 %v454
        %v524 = vunpack.c.l.b16 %v455
        %v525 = vunpack.c.h.b16 %v455
        %v526 = vunpack.c.l.b16 %v456
        %v527 = vunpack.c.h.b16 %v456
        %v528 = vunpack.c.l.b16 %v457
        %v529 = vunpack.c.h.b16 %v457
        %v530 = vunpack.c.l.b16 %v458
        %v531 = vunpack.c.h.b16 %v458
        %v532 = vunpack.c.l.b16 %v459
        %v533 = vunpack.c.h.b16 %v459
        %v534 = vunpack.c.l.b16 %v460
        %v535 = vunpack.c.h.b16 %v460
        %v536 = vunpack.c.l.b16 %v461
        %v537 = vunpack.c.h.b16 %v461
        %v538 = vunpack.c.l.b16 %v462
        %v539 = vunpack.c.h.b16 %v462
        %v540 = vunpack.c.l.b16 %v463
        %v541 = vunpack.c.h.b16 %v463
        %v542 = vunpack.c.l.b16 %v464
        %v543 = vunpack.c.h.b16 %v464
        %v544 = vunpack.c.l.b16 %v465
        %v545 = vunpack.c.h.b16 %v465
        %v546 = vpack.c.b16 %v516, %v514
        %v547 = vpack.c.b16 %v517, %v515
        %v548 = vpack.c.b16 %v520, %v518
        %v549 = vpack.c.b16 %v521, %v519
        %v550 = vpack.c.b16 %v524, %v522
        %v551 = vpack.c.b16 %v525, %v523
        %v552 = vpack.c.b16 %v528, %v526
        %v553 = vpack.c.b16 %v529, %v527
        %v554 = vpack.c.b16 %v532, %v530
        %v555 = vpack.c.b16 %v533, %v531
        %v556 = vpack.c.b16 %v536, %v534
        %v557 = vpack.c.b16 %v537, %v535
        %v558 = vpack.c.b16 %v540, %v538
        %v559 = vpack.c.b16 %v541, %v539
        %v560 = vpack.c.b16 %v544, %v542
        %v561 = vpack.c.b16 %v545, %v543
        %v610 = vunpack.c.l.b16 %v466
        %v611 = vunpack.c.l.b16 %v467
        %v612 = vunpack.c.l.b16 %v468
        %v613 = vunpack.c.l.b16 %v469
        %v614 = vunpack.c.l.b16 %v470
        %v615 = vunpack.c.l.b16 %v471
        %v616 = vunpack.c.l.b16 %v472
        %v617 = vunpack.c.l.b16 %v473
        %v618 = vunpack.c.l.b16 %v474
        %v619 = vunpack.c.l.b16 %v475
        %v620 = vunpack.c.l.b16 %v476
        %v621 = vunpack.c.l.b16 %v477
        %v622 = vunpack.c.l.b16 %v478
        %v623 = vunpack.c.l.b16 %v479
        %v624 = vunpack.c.l.b16 %v480
        %v625 = vunpack.c.l.b16 %v481
        %v626 = vunpack.c.l.b16 %v482
        %v627 = vunpack.c.l.b16 %v483
        %v628 = vunpack.c.l.b16 %v484
        %v629 = vunpack.c.l.b16 %v485
        %v630 = vunpack.c.l.b16 %v486
        %v631 = vunpack.c.l.b16 %v487
        %v632 = vunpack.c.l.b16 %v488
        %v633 = vunpack.c.l.b16 %v489
        %v634 = vunpack.c.l.b16 %v490
        %v635 = vunpack.c.l.b16 %v491
        %v636 = vunpack.c.l.b16 %v492
        %v637 = vunpack.c.l.b16 %v493
        %v638 = vunpack.c.l.b16 %v494
        %v639 = vunpack.c.l.b16 %v495
        %v640 = vunpack.c.l.b16 %v496
        %v641 = vunpack.c.l.b16 %v497
        %v642 = vpack.c.b16 %v611, %v610
        %v643 = vpack.c.b16 %v613, %v612
        %v644 = vpack.c.b16 %v615, %v614
        %v645 = vpack.c.b16 %v617, %v616
        %v646 = vpack.c.b16 %v619, %v618
        %v647 = vpack.c.b16 %v621, %v620
        %v648 = vpack.c.b16 %v623, %v622
        %v649 = vpack.c.b16 %v625, %v624
        %v650 = vpack.c.b16 %v627, %v626
        %v651 = vpack.c.b16 %v629, %v628
        %v652 = vpack.c.b16 %v631, %v630
        %v653 = vpack.c.b16 %v633, %v632
        %v654 = vpack.c.b16 %v635, %v634
        %v655 = vpack.c.b16 %v637, %v636
        %v656 = vpack.c.b16 %v639, %v638
        %v657 = vpack.c.b16 %v641, %v640
        %674 = vmatprep.subr.bf16.mxu0 0
        %675 = vmatpush1.bf16.msra.mxu0 %v642
        %676 = vmatprep.subr.bf16.mxu0 0
        %677 = vmatpush1.bf16.msra.mxu0 %v643
        %678 = vmatprep.subr.bf16.mxu0 0
        %679 = vmatpush1.bf16.msra.mxu0 %v644
        %680 = vmatprep.subr.bf16.mxu0 0
        %681 = vmatpush1.bf16.msra.mxu0 %v645
        %682 = vmatprep.subr.bf16.mxu0 0
        %683 = vmatpush1.bf16.msra.mxu0 %v646
        %684 = vmatprep.subr.bf16.mxu0 0
        %685 = vmatpush1.bf16.msra.mxu0 %v647
        %686 = vmatprep.subr.bf16.mxu0 0
        %687 = vmatpush1.bf16.msra.mxu0 %v648
        %688 = vmatprep.subr.bf16.mxu0 0
        %689 = vmatpush1.bf16.msra.mxu0 %v649
        %690 = vmatprep.subr.bf16.mxu0 0
        %691 = vmatpush1.bf16.msra.mxu0 %v650
        %692 = vmatprep.subr.bf16.mxu0 0
        %693 = vmatpush1.bf16.msra.mxu0 %v651
        %694 = vmatprep.subr.bf16.mxu0 0
        %695 = vmatpush1.bf16.msra.mxu0 %v652
        %696 = vmatprep.subr.bf16.mxu0 0
        %697 = vmatpush1.bf16.msra.mxu0 %v653
        %698 = vmatprep.subr.bf16.mxu0 0
        %699 = vmatpush1.bf16.msra.mxu0 %v654
        %700 = vmatprep.subr.bf16.mxu0 0
        %701 = vmatpush1.bf16.msra.mxu0 %v655
        %702 = vmatprep.subr.bf16.mxu0 0
        %703 = vmatpush1.bf16.msra.mxu0 %v656
        %704 = vmatprep.subr.bf16.mxu0 0
        %705 = vmatpush1.bf16.msra.mxu0 %v657
        %706 = vmatprep.mubr.bf16.mxu0 %v547
        %707 = vmatmul.mubr.bf16.gmra.mrb[0].mxu0 %v546
        %v708 = vpop.f32.mrb[0].mxu0
        %v709 = vadd.f32 0.0, %v708
        %v710 = vpop.f32.mrb[0].mxu0
        %v711 = vpop.f32.mrb[0].mxu0
        %v712 = vadd.f32 0.0, %v711
        %v713 = vpop.f32.mrb[0].mxu0
        %714 = vmatprep.mubr.bf16.mxu0 %v549
        %715 = vmatmul.mubr.bf16.gmra.mrb[0].mxu0 %v548
        %v716 = vpop.f32.mrb[0].mxu0
        %v717 = vadd.f32 0.0, %v716
        %v718 = vpop.f32.mrb[0].mxu0
        %v719 = vpop.f32.mrb[0].mxu0
        %v720 = vadd.f32 0.0, %v719
        %v721 = vpop.f32.mrb[0].mxu0
        %722 = vmatprep.mubr.bf16.mxu0 %v551
        %723 = vmatmul.mubr.bf16.gmra.mrb[0].mxu0 %v550
        %v724 = vpop.f32.mrb[0].mxu0
        %v725 = vadd.f32 0.0, %v724
        %v726 = vpop.f32.mrb[0].mxu0
        %v727 = vpop.f32.mrb[0].mxu0
        %v728 = vadd.f32 0.0, %v727
        %v729 = vpop.f32.mrb[0].mxu0
        %730 = vmatprep.mubr.bf16.mxu0 %v553
        %731 = vmatmul.mubr.bf16.gmra.mrb[0].mxu0 %v552
        %v732 = vpop.f32.mrb[0].mxu0
        %v733 = vadd.f32 0.0, %v732
        %v734 = vpop.f32.mrb[0].mxu0
        %v735 = vpop.f32.mrb[0].mxu0
        %v736 = vadd.f32 0.0, %v735
        %v737 = vpop.f32.mrb[0].mxu0
        %738 = vmatprep.mubr.bf16.mxu0 %v555
        %739 = vmatmul.mubr.bf16.gmra.mrb[0].mxu0 %v554
        %v740 = vpop.f32.mrb[0].mxu0
        %v741 = vadd.f32 0.0, %v740
        %v742 = vpop.f32.mrb[0].mxu0
        %v743 = vpop.f32.mrb[0].mxu0
        %v744 = vadd.f32 0.0, %v743
        %v745 = vpop.f32.mrb[0].mxu0
        %746 = vmatprep.mubr.bf16.mxu0 %v557
        %747 = vmatmul.mubr.bf16.gmra.mrb[0].mxu0 %v556
        %v748 = vpop.f32.mrb[0].mxu0
        %v749 = vadd.f32 0.0, %v748
        %v750 = vpop.f32.mrb[0].mxu0
        %v751 = vpop.f32.mrb[0].mxu0
        %v752 = vadd.f32 0.0, %v751
        %v753 = vpop.f32.mrb[0].mxu0
        %754 = vmatprep.mubr.bf16.mxu0 %v559
        %755 = vmatmul.mubr.bf16.gmra.mrb[0].mxu0 %v558
        %v756 = vpop.f32.mrb[0].mxu0
        %v757 = vadd.f32 0.0, %v756
        %v758 = vpop.f32.mrb[0].mxu0
        %v759 = vpop.f32.mrb[0].mxu0
        %v760 = vadd.f32 0.0, %v759
        %v761 = vpop.f32.mrb[0].mxu0
        %762 = vmatprep.mubr.bf16.mxu0 %v561
        %763 = vmatmul.mubr.bf16.gmra.mrb[0].mxu0 %v560
        %v764 = vpop.f32.mrb[0].mxu0
        %v765 = vadd.f32 0.0, %v764
        %v766 = vpop.f32.mrb[0].mxu0
        %v767 = vpop.f32.mrb[0].mxu0
        %v768 = vadd.f32 0.0, %v767
        %v769 = vpop.f32.mrb[0].mxu0
        %770 = vdwg.mxu0
        %v771 = vadd.f32 %v434, %v709
        %v772 = vadd.f32 %v435, %v712
        %v773 = vadd.f32 %v436, %v717
        %v774 = vadd.f32 %v437, %v720
        %v775 = vadd.f32 %v438, %v725
        %v776 = vadd.f32 %v439, %v728
        %v777 = vadd.f32 %v440, %v733
        %v778 = vadd.f32 %v441, %v736
        %v779 = vadd.f32 %v442, %v741
        %v780 = vadd.f32 %v443, %v744
        %v781 = vadd.f32 %v444, %v749
        %v782 = vadd.f32 %v445, %v752
        %v783 = vadd.f32 %v446, %v757
        %v784 = vadd.f32 %v447, %v760
        %v785 = vadd.f32 %v448, %v765
        %v786 = vadd.f32 %v449, %v768
        %787 = vst [vmem:[#allocation2] sm:$0xff] %v771
        %788 = vst [vmem:[#allocation2 + $0x8] sm:$0xff] %v772
        %789 = vst [vmem:[#allocation2 + $0x10] sm:$0xff] %v773
        %790 = vst [vmem:[#allocation2 + $0x18] sm:$0xff] %v774
        %791 = vst [vmem:[#allocation2 + $0x20] sm:$0xff] %v775
        %792 = vst [vmem:[#allocation2 + $0x28] sm:$0xff] %v776
        %793 = vst [vmem:[#allocation2 + $0x30] sm:$0xff] %v777
        %794 = vst [vmem:[#allocation2 + $0x38] sm:$0xff] %v778
        %795 = vst [vmem:[#allocation2 + $0x40] sm:$0xff] %v779
        %796 = vst [vmem:[#allocation2 + $0x48] sm:$0xff] %v780
        %797 = vst [vmem:[#allocation2 + $0x50] sm:$0xff] %v781
        %798 = vst [vmem:[#allocation2 + $0x58] sm:$0xff] %v782
        %799 = vst [vmem:[#allocation2 + $0x60] sm:$0xff] %v783
        %800 = vst [vmem:[#allocation2 + $0x68] sm:$0xff] %v784
        %801 = vst [vmem:[#allocation2 + $0x70] sm:$0xff] %v785
        %802 = vst [vmem:[#allocation2 + $0x78] sm:$0xff] %v786
        // Predicated region
        $region78: #{ffn_forward.1} parent=68 // pred_check
          %p803 = pneg %p414
        $region79: #{ffn_forward.1} parent=68 // pred_check_branch
          %805 = sbr.rel (%p803) target = $region81
        $region80: #{ffn_forward.1} parent=68 // pred_region
          %v806 = vld [vmem:[#allocation2] sm:$0xff]
          %v807 = vld [vmem:[#allocation2 + $0x8] sm:$0xff]
          %v808 = vld [vmem:[#allocation2 + $0x10] sm:$0xff]
          %v809 = vld [vmem:[#allocation2 + $0x18] sm:$0xff]
          %v810 = vld [vmem:[#allocation2 + $0x20] sm:$0xff]
          %v811 = vld [vmem:[#allocation2 + $0x28] sm:$0xff]
          %v812 = vld [vmem:[#allocation2 + $0x30] sm:$0xff]
          %v813 = vld [vmem:[#allocation2 + $0x38] sm:$0xff]
          %v814 = vld [vmem:[#allocation2 + $0x40] sm:$0xff]
          %v815 = vld [vmem:[#allocation2 + $0x48] sm:$0xff]
          %v816 = vld [vmem:[#allocation2 + $0x50] sm:$0xff]
          %v817 = vld [vmem:[#allocation2 + $0x58] sm:$0xff]
          %v818 = vld [vmem:[#allocation2 + $0x60] sm:$0xff]
          %v819 = vld [vmem:[#allocation2 + $0x68] sm:$0xff]
          %v820 = vld [vmem:[#allocation2 + $0x70] sm:$0xff]
          %v821 = vld [vmem:[#allocation2 + $0x78] sm:$0xff]
          %v822 = vld [vmem:[%s411] sm:$0x1]
          %v824 = vlaneseq
          %v825 = vshrl.u32 %v824, 7
          %v826 = vsub.s32 0, %v825
          %v827 = vrot.slane %v822, %v826
          %v829 = vadd.f32 %v806, %v827
          %v830 = vadd.f32 %v807, %v827
          %v831 = vadd.f32 %v808, %v827
          %v832 = vadd.f32 %v809, %v827
          %v833 = vadd.f32 %v810, %v827
          %v834 = vadd.f32 %v811, %v827
          %v835 = vadd.f32 %v812, %v827
          %v836 = vadd.f32 %v813, %v827
          %v837 = vadd.f32 %v814, %v827
          %v838 = vadd.f32 %v815, %v827
          %v839 = vadd.f32 %v816, %v827
          %v840 = vadd.f32 %v817, %v827
          %v841 = vadd.f32 %v818, %v827
          %v842 = vadd.f32 %v819, %v827
          %v843 = vadd.f32 %v820, %v827
          %v844 = vadd.f32 %v821, %v827
          %v845 = vmax.f32 %v829, 0.0
          %v846 = vmax.f32 %v830, 0.0
          %v847 = vmax.f32 %v831, 0.0
          %v848 = vmax.f32 %v832, 0.0
          %v849 = vmax.f32 %v833, 0.0
          %v850 = vmax.f32 %v834, 0.0
          %v851 = vmax.f32 %v835, 0.0
          %v852 = vmax.f32 %v836, 0.0
          %v853 = vmax.f32 %v837, 0.0
          %v854 = vmax.f32 %v838, 0.0
          %v855 = vmax.f32 %v839, 0.0
          %v856 = vmax.f32 %v840, 0.0
          %v857 = vmax.f32 %v841, 0.0
          %v858 = vmax.f32 %v842, 0.0
          %v859 = vmax.f32 %v843, 0.0
          %v860 = vmax.f32 %v844, 0.0
          %861 = vst [vmem:[%s395] sm:$0xff] %v845
          %862 = vst [vmem:[%s395 + $0x8] sm:$0xff] %v846
          %863 = vst [vmem:[%s395 + $0x10] sm:$0xff] %v847
          %864 = vst [vmem:[%s395 + $0x18] sm:$0xff] %v848
          %865 = vst [vmem:[%s395 + $0x20] sm:$0xff] %v849
          %866 = vst [vmem:[%s395 + $0x28] sm:$0xff] %v850
          %867 = vst [vmem:[%s395 + $0x30] sm:$0xff] %v851
          %868 = vst [vmem:[%s395 + $0x38] sm:$0xff] %v852
          %869 = vst [vmem:[%s395 + $0x40] sm:$0xff] %v853
          %870 = vst [vmem:[%s395 + $0x48] sm:$0xff] %v854
          %871 = vst [vmem:[%s395 + $0x50] sm:$0xff] %v855
          %872 = vst [vmem:[%s395 + $0x58] sm:$0xff] %v856
          %873 = vst [vmem:[%s395 + $0x60] sm:$0xff] %v857
          %874 = vst [vmem:[%s395 + $0x68] sm:$0xff] %v858
          %875 = vst [vmem:[%s395 + $0x70] sm:$0xff] %v859
          %876 = vst [vmem:[%s395 + $0x78] sm:$0xff] %v860
        $region81: #{ffn_forward.1} parent=68 // pred_fallthru
          _
        %s877 = sand.u32 %s125, 1
        %s878 = sand.u32 %s125, 1
        %s879 = smul.addr %s878, 128
        %s880 = scalar_lea.vmem [#allocation4], %s879
        // Predicated region
        $region82: #{ffn_forward.1} parent=68 // pred_check
          %p881 = pneg %p135
        $region83: #{ffn_forward.1} parent=68 // pred_check_branch
          %883 = sbr.rel (%p881) target = $region85
        $region84: #{ffn_forward.1} parent=68 // pred_region
          %s884 = smul.u32 16, %s19
          %s885 = smul.addr %s884, 2
          %s886 = sadd.s32 %s20, %s885
          %s887 = smul.addr %s886, 8
          %s888 = scalar_lea.vmem %s3, %s887
          // Predicated region
          $region86: #{ffn_forward.1} parent=84 // pred_check
            _
          $region87: #{ffn_forward.1} parent=84 // pred_check_branch
            %890 = sbr.rel (0) target = $region89
          $region88: #{ffn_forward.1} parent=84 // pred_region
            // Predicated region
            $region90: #{ffn_forward.1} parent=88 // pred_check
              _
            $region91: #{ffn_forward.1} parent=88 // pred_check_branch
              %892 = sbr.rel (0) target = $region93
            $region92: #{ffn_forward.1} parent=88 // pred_region
              // Predicated region
              $region105: #{ffn_forward.1} parent=92 // pred_check
                _
              $region106: #{ffn_forward.1} parent=92 // pred_check_branch
                %937 = sbr.rel (0) target = $region108
              $region107: #{ffn_forward.1} parent=92 // pred_region
                loop: start=0, step=1, limit=1
                $region109: #{ffn_forward.1} parent=107 // loop_pre_header
                  _
                $region110: #{ffn_forward.1} parent=107 // loop_header
                  %s939 = sphi 0, %s943
                  %p940 = scmp.ge.s32.totalorder %s939, 1
                  %s944 = sphi %s880, %s880
                  %s945 = sphi %s888, %s888
                $region111: #{ffn_forward.1} parent=107 // loop_header_branch
                  %942 = sbr.rel (%p940) target = $region115
                $region112: #{ffn_forward.1} parent=107 // loop_body
                  %v946 = vld [vmem:[%s944] sm:$0xff]
                  %947 = vst [vmem:[%s945] sm:$0xff] %v946
                  %v948 = vld [vmem:[%s944 + $0x8] sm:$0xff]
                  %949 = vst [vmem:[%s945 + $0x10] sm:$0xff] %v948
                  %v950 = vld [vmem:[%s944 + $0x10] sm:$0xff]
                  %951 = vst [vmem:[%s945 + $0x20] sm:$0xff] %v950
                  %v952 = vld [vmem:[%s944 + $0x18] sm:$0xff]
                  %953 = vst [vmem:[%s945 + $0x30] sm:$0xff] %v952
                  %v954 = vld [vmem:[%s944 + $0x20] sm:$0xff]
                  %955 = vst [vmem:[%s945 + $0x40] sm:$0xff] %v954
                  %v956 = vld [vmem:[%s944 + $0x28] sm:$0xff]
                  %957 = vst [vmem:[%s945 + $0x50] sm:$0xff] %v956
                  %v958 = vld [vmem:[%s944 + $0x30] sm:$0xff]
                  %959 = vst [vmem:[%s945 + $0x60] sm:$0xff] %v958
                  %v960 = vld [vmem:[%s944 + $0x38] sm:$0xff]
                  %961 = vst [vmem:[%s945 + $0x70] sm:$0xff] %v960
                  %v962 = vld [vmem:[%s944 + $0x40] sm:$0xff]
                  %963 = vst [vmem:[%s945 + $0x80] sm:$0xff] %v962
                  %v964 = vld [vmem:[%s944 + $0x48] sm:$0xff]
                  %965 = vst [vmem:[%s945 + $0x90] sm:$0xff] %v964
                  %v966 = vld [vmem:[%s944 + $0x50] sm:$0xff]
                  %967 = vst [vmem:[%s945 + $0xa0] sm:$0xff] %v966
                  %v968 = vld [vmem:[%s944 + $0x58] sm:$0xff]
                  %969 = vst [vmem:[%s945 + $0xb0] sm:$0xff] %v968
                  %v970 = vld [vmem:[%s944 + $0x60] sm:$0xff]
                  %971 = vst [vmem:[%s945 + $0xc0] sm:$0xff] %v970
                  %v972 = vld [vmem:[%s944 + $0x68] sm:$0xff]
                  %973 = vst [vmem:[%s945 + $0xd0] sm:$0xff] %v972
                  %v974 = vld [vmem:[%s944 + $0x70] sm:$0xff]
                  %975 = vst [vmem:[%s945 + $0xe0] sm:$0xff] %v974
                  %v976 = vld [vmem:[%s944 + $0x78] sm:$0xff]
                  %977 = vst [vmem:[%s945 + $0xf0] sm:$0xff] %v976
                $region113: #{ffn_forward.1} parent=107 // loop_footer
                  %s943 = sadd.s32 1, %s939
                $region114: #{ffn_forward.1} parent=107 // loop_footer_branch
                  %938 = sbr.rel target = $region110
                $region115: #{ffn_forward.1} parent=107 // loop_exit
                  _
              $region108: #{ffn_forward.1} parent=92 // pred_fallthru
                _
              // Predicated region
              $region116: #{ffn_forward.1} parent=92 // pred_check
                _
              $region117: #{ffn_forward.1} parent=92 // pred_check_branch
                %979 = sbr.rel target = $region119
              $region118: #{ffn_forward.1} parent=92 // pred_region
                _
              $region119: #{ffn_forward.1} parent=92 // pred_fallthru
                _
            $region93: #{ffn_forward.1} parent=88 // pred_fallthru
              _
            // Predicated region
            $region94: #{ffn_forward.1} parent=88 // pred_check
              _
            $region95: #{ffn_forward.1} parent=88 // pred_check_branch
              %894 = sbr.rel target = $region97
            $region96: #{ffn_forward.1} parent=88 // pred_region
              loop: start=0, step=1, limit=1
              $region98: #{ffn_forward.1} parent=96 // loop_pre_header
                _
              $region99: #{ffn_forward.1} parent=96 // loop_header
                %s897 = sphi 0, %s901
                %p898 = scmp.ge.s32.totalorder %s897, 1
                %s902 = sphi %s880, %s880
                %s903 = sphi %s888, %s888
              $region100: #{ffn_forward.1} parent=96 // loop_header_branch
                %900 = sbr.rel (%p898) target = $region104
              $region101: #{ffn_forward.1} parent=96 // loop_body
                %v904 = vld [vmem:[%s902] sm:$0xff]
                %905 = vst [vmem:[%s903] sm:$0xff] %v904
                %v906 = vld [vmem:[%s902 + $0x8] sm:$0xff]
                %907 = vst [vmem:[%s903 + $0x10] sm:$0xff] %v906
                %v908 = vld [vmem:[%s902 + $0x10] sm:$0xff]
                %909 = vst [vmem:[%s903 + $0x20] sm:$0xff] %v908
                %v910 = vld [vmem:[%s902 + $0x18] sm:$0xff]
                %911 = vst [vmem:[%s903 + $0x30] sm:$0xff] %v910
                %v912 = vld [vmem:[%s902 + $0x20] sm:$0xff]
                %913 = vst [vmem:[%s903 + $0x40] sm:$0xff] %v912
                %v914 = vld [vmem:[%s902 + $0x28] sm:$0xff]
                %915 = vst [vmem:[%s903 + $0x50] sm:$0xff] %v914
                %v916 = vld [vmem:[%s902 + $0x30] sm:$0xff]
                %917 = vst [vmem:[%s903 + $0x60] sm:$0xff] %v916
                %v918 = vld [vmem:[%s902 + $0x38] sm:$0xff]
                %919 = vst [vmem:[%s903 + $0x70] sm:$0xff] %v918
                %v920 = vld [vmem:[%s902 + $0x40] sm:$0xff]
                %921 = vst [vmem:[%s903 + $0x80] sm:$0xff] %v920
                %v922 = vld [vmem:[%s902 + $0x48] sm:$0xff]
                %923 = vst [vmem:[%s903 + $0x90] sm:$0xff] %v922
                %v924 = vld [vmem:[%s902 + $0x50] sm:$0xff]
                %925 = vst [vmem:[%s903 + $0xa0] sm:$0xff] %v924
                %v926 = vld [vmem:[%s902 + $0x58] sm:$0xff]
                %927 = vst [vmem:[%s903 + $0xb0] sm:$0xff] %v926
                %v928 = vld [vmem:[%s902 + $0x60] sm:$0xff]
                %929 = vst [vmem:[%s903 + $0xc0] sm:$0xff] %v928
                %v930 = vld [vmem:[%s902 + $0x68] sm:$0xff]
                %931 = vst [vmem:[%s903 + $0xd0] sm:$0xff] %v930
                %v932 = vld [vmem:[%s902 + $0x70] sm:$0xff]
                %933 = vst [vmem:[%s903 + $0xe0] sm:$0xff] %v932
                %v934 = vld [vmem:[%s902 + $0x78] sm:$0xff]
                %935 = vst [vmem:[%s903 + $0xf0] sm:$0xff] %v934
              $region102: #{ffn_forward.1} parent=96 // loop_footer
                %s901 = sadd.s32 1, %s897
              $region103: #{ffn_forward.1} parent=96 // loop_footer_branch
                %896 = sbr.rel target = $region99
              $region104: #{ffn_forward.1} parent=96 // loop_exit
                _
            $region97: #{ffn_forward.1} parent=88 // pred_fallthru
              _
          $region89: #{ffn_forward.1} parent=84 // pred_fallthru
            _
          %980 = vnop
        $region85: #{ffn_forward.1} parent=68 // pred_fallthru
          _
      $region69: #{ffn_forward.1} parent=5 // pred_fallthru
        _
      %p981 = scmp.le.s32.totalorder 2, %s9
      // Predicated region
      $region120: #{ffn_forward.1} parent=5 // pred_check
        %p982 = pneg %p981
      $region121: #{ffn_forward.1} parent=5 // pred_check_branch
        %984 = sbr.rel (%p982) target = $region123
      $region122: #{ffn_forward.1} parent=5 // pred_region
        %s985 = ssub.s32 %s9, 2
        // Predicated region
        $region124: #{ffn_forward.1} parent=122 // pred_check
          %p986 = pneg %p141
        $region125: #{ffn_forward.1} parent=122 // pred_check_branch
          %988 = sbr.rel (%p986) target = $region127
        $region126: #{ffn_forward.1} parent=122 // pred_region
          %s989 = sand.u32 %s126, 1
          %s990 = sand.u32 %s126, 1
          %s991 = smul.addr %s990, 128
          %s992 = scalar_lea.vmem [#allocation4], %s991
        $region127: #{ffn_forward.1} parent=122 // pred_fallthru
          _
      $region123: #{ffn_forward.1} parent=5 // pred_fallthru
        _
    $region6: #{ffn_forward.1} parent=1 // loop_footer
      %s13 = sadd.s32 1, %s9
    $region7: #{ffn_forward.1} parent=1 // loop_footer_branch
      %8 = sbr.rel target = $region3
    $region8: #{ffn_forward.1} parent=1 // loop_exit
      _

</llo_original>
